<compile_context>
chip_gen: v6e
topology: v6e:2x2x1
jax: 0.10.0
libtpu: 0.0.40
codegen_flags: <defaults>
</compile_context>

<pallas_src>
import numpy as np
import jax
import jax.numpy as jnp
from jax.experimental import pallas as pl
from jax.experimental.pallas import tpu as pltpu


# ---------------------------------------------------------------------------
# MADE mask construction (numpy glue; mirrors MaskedLinear._get_mask_and_degrees
# for the non-output, non-random case used by MaskedResidualBlock).
# ---------------------------------------------------------------------------
def _get_input_degrees(n):
    return np.arange(1, n + 1, dtype=np.int64)


def _masked_linear_mask_and_degrees(in_degrees, out_features, autoregressive_features):
    max_ = max(1, autoregressive_features - 1)
    min_ = min(1, autoregressive_features - 1)
    out_degrees = np.arange(out_features, dtype=np.int64) % max_ + min_
    mask = (out_degrees[:, None] >= in_degrees[None, :]).astype(np.float32)  # [out, in]
    return mask, out_degrees


def _round_up(v, m):
    return (v + m - 1) // m * m


# ---------------------------------------------------------------------------
# Kernel: two pre-masked matmuls (+bias) with relus and the residual add.
# Weights arrive already mask-folded AND transposed to [in, out] -> h @ W on the MXU.
# ---------------------------------------------------------------------------
def masked_resblock_kernel(x_ref, w0_ref, b0_ref, w1_ref, b1_ref, o_ref):
    x = x_ref[...]                                     # [TB, Fp] f32
    h = jnp.maximum(x, 0.0)                            # activation(inputs)
    h = jnp.dot(h.astype(w0_ref.dtype), w0_ref[...],   # MaskedLinear 0 (mask pre-folded)
                preferred_element_type=jnp.float32) + b0_ref[...]
    h = jnp.maximum(h, 0.0)                            # activation (+ dropout p=0 -> identity)
    h = jnp.dot(h.astype(w1_ref.dtype), w1_ref[...],   # MaskedLinear 1
                preferred_element_type=jnp.float32) + b1_ref[...]
    o_ref[...] = x + h                                 # residual


# Weights/biases have a constant index_map -> single-buffer them (halves resident VMEM).
_SINGLE_BUFFER = {"pipeline_mode": pl.Buffered(1)} if hasattr(pl, "Buffered") else {}


def _vmem_limit_bytes(tile_b, f_pad, w_itemsize):
    weights = 2 * f_pad * f_pad * w_itemsize           # single-buffered (Buffered(1))
    biases = 2 * f_pad * 4
    io = 2 * 2 * tile_b * f_pad * 4                    # x/out tiles, double-buffered
    need = weights + biases + io + (4 << 20)           # + compiler-scratch headroom
    try:
        cap = int(pltpu.get_tpu_info().vmem_capacity_bytes)
    except Exception:
        cap = 64 << 20                                  # conservative (v7x per-core)
    return int(min(cap, max(need, 32 << 20)))


def make_masked_residual_block(w0, b0, m0, w1, b1, m1, *, exact_f32=False, tile_b=None):
    """One-time parameter prep (mask fold, transpose, lane-pad, dtype cast); returns a
    jitted apply(x) so the per-call path is only the Pallas kernel.

    w*: [out, in] (PyTorch layout), b*: [out], m*: [out, in]."""
    F = int(np.shape(b0)[0])
    F_pad = _round_up(max(F, 128), 128)
    w_dtype = jnp.float32 if exact_f32 else jnp.bfloat16
    w_itemsize = 4 if exact_f32 else 2

    def _prep_weight(w, m):
        wm = (jnp.asarray(w, jnp.float32) * jnp.asarray(m, jnp.float32)).T   # [in, out]
        if F_pad != F:
            wm = jnp.zeros((F_pad, F_pad), jnp.float32).at[:F, :F].set(wm)
        return wm.astype(w_dtype)

    def _prep_bias(b):
        b = jnp.asarray(b, jnp.float32).reshape(1, F)
        if F_pad != F:
            b = jnp.zeros((1, F_pad), jnp.float32).at[:, :F].set(b)
        return b

    w0_p = _prep_weight(w0, m0)
    w1_p = _prep_weight(w1, m1)
    b0_p = _prep_bias(b0)
    b1_p = _prep_bias(b1)

    @jax.jit
    def apply(x):
        B, Fin = x.shape
        assert Fin == F, f"expected {F} features, got {Fin}"
        x32 = x.astype(jnp.float32)
        # Only pad the feature dim when it is not lane-aligned (avoids extra HBM passes).
        x_in = x32 if F_pad == F else jnp.zeros((B, F_pad), jnp.float32).at[:, :F].set(x32)

        tb = tile_b
        if tb is None:
            # >=2 batch tiles when possible (keeps both v7x TensorCores busy; ~free on
            # v5e/v6e since weights are fetched once), capped at 512 rows.
            tb = min(512, max(8, _round_up(pl.cdiv(B, 2), 8)))
        assert tb % 8 == 0, "tile_b must be a multiple of 8 (sublane width)"

        grid = (pl.cdiv(B, tb),)   # partial last tile handled by Pallas; no batch padding
        flops = 4 * B * F_pad * F_pad
        bytes_accessed = (2 * B * F_pad * 4                    # x + out
                          + 2 * F_pad * F_pad * w_itemsize     # weights
                          + 2 * F_pad * 4)                     # biases

        out = pl.pallas_call(
            masked_resblock_kernel,
            out_shape=jax.ShapeDtypeStruct((B, F_pad), jnp.float32),
            grid_spec=pltpu.PrefetchScalarGridSpec(
                num_scalar_prefetch=0,
                grid=grid,
                in_specs=[
                    pl.BlockSpec((tb, F_pad), lambda i: (i, 0)),                       # x tile
                    pl.BlockSpec((F_pad, F_pad), lambda i: (0, 0), **_SINGLE_BUFFER),  # masked W0^T
                    pl.BlockSpec((1, F_pad), lambda i: (0, 0), **_SINGLE_BUFFER),      # b0
                    pl.BlockSpec((F_pad, F_pad), lambda i: (0, 0), **_SINGLE_BUFFER),  # masked W1^T
                    pl.BlockSpec((1, F_pad), lambda i: (0, 0), **_SINGLE_BUFFER),      # b1
                ],
                out_specs=pl.BlockSpec((tb, F_pad), lambda i: (i, 0)),
            ),
            compiler_params=pltpu.CompilerParams(
                dimension_semantics=("parallel",),
                vmem_limit_bytes=_vmem_limit_bytes(tb, F_pad, w_itemsize),
            ),
            cost_estimate=pl.CostEstimate(
                flops=flops, transcendentals=0, bytes_accessed=bytes_accessed),
        )(x_in, w0_p, b0_p, w1_p, b1_p)

        return out if F_pad == F else out[:, :F]

    return apply


if __name__ == "__main__":
    # Small, valid configuration: autoregressive_features=4, hidden features=32, batch=16.
    AF = 4
    F_feat = 32
    B = 16

    # Hidden-layer degree vector (arange(F) % (AF-1) + 1): satisfies the block's
    # "output degrees >= input degrees" constraint.
    in_degrees = np.arange(F_feat, dtype=np.int64) % max(1, AF - 1) + min(1, AF - 1)

    m0, deg0 = _masked_linear_mask_and_degrees(in_degrees, F_feat, AF)
    m1, deg1 = _masked_linear_mask_and_degrees(deg0, F_feat, AF)
    assert np.all(deg1 >= in_degrees), "degree constraint violated"

    # Deterministic synthetic parameters (linear_1 ~ U(-1e-3, 1e-3) per zero_initialization).
    key = jax.random.PRNGKey(0)
    k_x, k_w0, k_b0, k_w1, k_b1 = jax.random.split(key, 5)
    bound0 = 1.0 / np.sqrt(F_feat)
    w0 = jax.random.uniform(k_w0, (F_feat, F_feat), jnp.float32, -bound0, bound0)   # [out, in]
    b0 = jax.random.uniform(k_b0, (F_feat,), jnp.float32, -bound0, bound0)
    w1 = jax.random.uniform(k_w1, (F_feat, F_feat), jnp.float32, -1e-3, 1e-3)       # [out, in]
    b1 = jax.random.uniform(k_b1, (F_feat,), jnp.float32, -1e-3, 1e-3)
    x = jax.random.normal(k_x, (B, F_feat), jnp.float32)

    # Pure-JAX reference.
    def ref(xx):
        h = jnp.maximum(xx, 0.0)
        h = h @ (w0 * m0).T + b0
        h = jnp.maximum(h, 0.0)
        h = h @ (w1 * m1).T + b1
        return xx + h

    ref_out = ref(x)

    # Default path: bf16 MXU, f32 accumulation / bias / residual.
    block = make_masked_residual_block(w0, b0, m0, w1, b1, m1)
    out = jax.block_until_ready(block(x))
    assert out.shape == (B, F_feat)
    assert jnp.allclose(out, ref_out, atol=1e-2, rtol=1e-2), "bf16 path mismatch vs reference"

    # Bit-parity f32 path (matches PyTorch numerics) with a tight tolerance.
    block_f32 = make_masked_residual_block(w0, b0, m0, w1, b1, m1, exact_f32=True)
    out_f32 = jax.block_until_ready(block_f32(x))
    assert jnp.allclose(out_f32, ref_out, atol=1e-5, rtol=1e-5), "f32 path mismatch vs reference"

    print("KERNEL_OK")
</pallas_src>

<mosaic_0001>
module attributes {stable_mosaic.version = 11 : i64} {
  func.func @masked_resblock_kernel(%arg0: i32, %arg1: memref<8x128xf32, #tpu.memory_space<vmem>>, %arg2: memref<128x128xbf16, #tpu.memory_space<vmem>>, %arg3: memref<1x128xf32, #tpu.memory_space<vmem>>, %arg4: memref<128x128xbf16, #tpu.memory_space<vmem>>, %arg5: memref<1x128xf32, #tpu.memory_space<vmem>>, %arg6: memref<8x128xf32, #tpu.memory_space<vmem>>) attributes {dimension_semantics = [#tpu.dimension_semantics<parallel>], iteration_bounds = array<i64: 2>, scalar_prefetch = 0 : i64, scratch_operands = 0 : i64, tpu.core_type = #tpu.core_type<tc>, window_params = [{transform_indices = @transform_0, window_bounds = array<i64: 8, 128>}, {pipeline_mode = #tpu.pipeline_mode<synchronous>, transform_indices = @transform_1, window_bounds = array<i64: 128, 128>}, {pipeline_mode = #tpu.pipeline_mode<synchronous>, transform_indices = @transform_2, window_bounds = array<i64: 1, 128>}, {pipeline_mode = #tpu.pipeline_mode<synchronous>, transform_indices = @transform_3, window_bounds = array<i64: 128, 128>}, {pipeline_mode = #tpu.pipeline_mode<synchronous>, transform_indices = @transform_4, window_bounds = array<i64: 1, 128>}, {transform_indices = @transform_5, window_bounds = array<i64: 8, 128>}]} {
    %c0 = arith.constant 0 : index
    %c0_0 = arith.constant 0 : index
    %0 = vector.load %arg1[%c0, %c0_0] : memref<8x128xf32, #tpu.memory_space<vmem>>, vector<8x128xf32>
    %cst = arith.constant 0.000000e+00 : f32
    %1 = vector.broadcast %cst : f32 to vector<8x128xf32>
    %2 = arith.maximumf %0, %1 : vector<8x128xf32>
    %3 = arith.truncf %2 : vector<8x128xf32> to vector<8x128xbf16>
    %c0_1 = arith.constant 0 : index
    %c0_2 = arith.constant 0 : index
    %4 = vector.load %arg2[%c0_1, %c0_2] : memref<128x128xbf16, #tpu.memory_space<vmem>>, vector<128x128xbf16>
    %cst_3 = arith.constant dense<0.000000e+00> : vector<8x128xf32>
    %5 = tpu.matmul %3, %4, %cst_3 {dimension_numbers = #tpu.dot_dimension_numbers<[1], [0], [0], [1], [0, 0, 1, 1], [], []>} : vector<8x128xbf16>, vector<128x128xbf16>, vector<8x128xf32> -> vector<8x128xf32>
    %c0_4 = arith.constant 0 : index
    %c0_5 = arith.constant 0 : index
    %6 = vector.load %arg3[%c0_4, %c0_5] : memref<1x128xf32, #tpu.memory_space<vmem>>, vector<1x128xf32>
    %7 = vector.broadcast %6 : vector<1x128xf32> to vector<8x128xf32>
    %8 = arith.addf %5, %7 : vector<8x128xf32>
    %cst_6 = arith.constant 0.000000e+00 : f32
    %9 = vector.broadcast %cst_6 : f32 to vector<8x128xf32>
    %10 = arith.maximumf %8, %9 : vector<8x128xf32>
    %11 = arith.truncf %10 : vector<8x128xf32> to vector<8x128xbf16>
    %c0_7 = arith.constant 0 : index
    %c0_8 = arith.constant 0 : index
    %12 = vector.load %arg4[%c0_7, %c0_8] : memref<128x128xbf16, #tpu.memory_space<vmem>>, vector<128x128xbf16>
    %cst_9 = arith.constant dense<0.000000e+00> : vector<8x128xf32>
    %13 = tpu.matmul %11, %12, %cst_9 {dimension_numbers = #tpu.dot_dimension_numbers<[1], [0], [0], [1], [0, 0, 1, 1], [], []>} : vector<8x128xbf16>, vector<128x128xbf16>, vector<8x128xf32> -> vector<8x128xf32>
    %c0_10 = arith.constant 0 : index
    %c0_11 = arith.constant 0 : index
    %14 = vector.load %arg5[%c0_10, %c0_11] : memref<1x128xf32, #tpu.memory_space<vmem>>, vector<1x128xf32>
    %15 = vector.broadcast %14 : vector<1x128xf32> to vector<8x128xf32>
    %16 = arith.addf %13, %15 : vector<8x128xf32>
    %17 = arith.addf %0, %16 : vector<8x128xf32>
    %c0_12 = arith.constant 0 : index
    %c0_13 = arith.constant 0 : index
    %18 = vector.load %arg6[%c0_12, %c0_13] : memref<8x128xf32, #tpu.memory_space<vmem>>, vector<8x128xf32>
    tpu.vector_store %arg6[%c0_12, %c0_13], %17 {strides = array<i32>} : memref<8x128xf32, #tpu.memory_space<vmem>>, vector<8x128xf32>,
    return
  }
  func.func @transform_0(%arg0: i32) -> (i32, i32) {
    %c0_i32 = arith.constant 0 : i32
    %c0_i32_0 = arith.constant 0 : i32
    return %arg0, %c0_i32 : i32, i32
  }
  func.func @transform_1(%arg0: i32) -> (i32, i32) {
    %c0_i32 = arith.constant 0 : i32
    %c0_i32_0 = arith.constant 0 : i32
    %c0_i32_1 = arith.constant 0 : i32
    return %c0_i32, %c0_i32_0 : i32, i32
  }
  func.func @transform_2(%arg0: i32) -> (i32, i32) {
    %c0_i32 = arith.constant 0 : i32
    %c0_i32_0 = arith.constant 0 : i32
    %c0_i32_1 = arith.constant 0 : i32
    return %c0_i32, %c0_i32_0 : i32, i32
  }
  func.func @transform_3(%arg0: i32) -> (i32, i32) {
    %c0_i32 = arith.constant 0 : i32
    %c0_i32_0 = arith.constant 0 : i32
    %c0_i32_1 = arith.constant 0 : i32
    return %c0_i32, %c0_i32_0 : i32, i32
  }
  func.func @transform_4(%arg0: i32) -> (i32, i32) {
    %c0_i32 = arith.constant 0 : i32
    %c0_i32_0 = arith.constant 0 : i32
    %c0_i32_1 = arith.constant 0 : i32
    return %c0_i32, %c0_i32_0 : i32, i32
  }
  func.func @transform_5(%arg0: i32) -> (i32, i32) {
    %c0_i32 = arith.constant 0 : i32
    %c0_i32_0 = arith.constant 0 : i32
    return %arg0, %c0_i32 : i32, i32
  }
}

</mosaic_0001>

<llo_original>
// kernel: apply.1
$region0: #{apply.1}
  #allocation0 [shape = 'u32[]', space=smem, size = 0x4, offset = 0x4, fixed_abs, tag = 'smem constant byte address 0x4 - core index']
  #allocation1 [shape = 'u32[144,128]{1,0:T(1,128)}', space=vmem, size = 0x12000, scoped, tag = 'internal scratch']
  %s0 = inlined_call_operand.vmem [shape: f32[16,128], index: 0, kind: input, shape index: {}]
  %s1 = inlined_call_operand.hbm [shape: bf16[128,128], index: 1, kind: input, shape index: {}]
  %s2 = inlined_call_operand.vmem [shape: f32[1,128], index: 2, kind: input, shape index: {}]
  %s3 = inlined_call_operand.vmem [shape: bf16[128,128], index: 3, kind: input, shape index: {}]
  %s4 = inlined_call_operand.vmem [shape: f32[1,128], index: 4, kind: input, shape index: {}]
  %s5 = inlined_call_operand.hbm [shape: f32[16,128], index: 5, kind: output, shape index: {}]
  %s6 = sld [smem:[#allocation0]]
  $region57: #{apply.1} parent=0
    _
  %s8 = ssub.s32 1, %s6
  %s9 = scalar_select 0, %s8, %s6
  $region1: #{apply.1} parent=0
    #allocation2 [shape = 'u8[32768]{0}', space=vmem, size = 0x8000, scoped, tag = 'input window, operand 1, single buffered']
    #allocation3 [shape = 's32[2]{0}', space=sflag, size = 0x8, scoped, tag = 'scoped memory for apply.1']
    #allocation4 [shape = 's32[2]{0}', space=sflag, size = 0x8, scoped, tag = 'scoped memory for apply.1']
    #allocation5 [shape = 'u8[8192]{0}', space=vmem, size = 0x2000, scoped, tag = 'output window, operand 0']
    %10 = vsyncpa [#allocation3], 0
    %11 = vsyncpa [#allocation4], 0
    %s12 = scalar_lea.sflag [#allocation4], 1
    %13 = vsyncpa %s12, 0
    loop: start=0, step=1, limit=4
    $region2: #{apply.1} parent=1 // loop_pre_header
      _
    $region3: #{apply.1} parent=1 // loop_header
      %s15 = sphi 0, %s19
      %p16 = scmp.ge.s32.totalorder %s15, 4
      %s25 = sphi 0, %s27
      %s28 = sphi 0, %s25
      %s29 = sphi 0, %s28
      %s45 = sphi 0, %s29
      %s49 = sphi 0, %s49
      %s51 = sphi 0, %s49
      %s52 = sphi 0, %s51
      %s66 = sphi 0, %s52
      %s70 = sphi 0, %s70
      %s72 = sphi 0, %s70
      %s73 = sphi 0, %s72
      %s87 = sphi 0, %s73
      %s91 = sphi 0, %s91
      %s93 = sphi 0, %s91
      %s94 = sphi 0, %s93
      %s108 = sphi 0, %s94
      %s112 = sphi 0, %s112
      %s114 = sphi 0, %s112
      %s115 = sphi 0, %s114
      %s129 = sphi 0, %s115
      %s135 = sphi 0, %s137
      %s138 = sphi 0, %s135
      %s139 = sphi 0, %s138
      %s155 = sphi 0, %s139
    $region4: #{apply.1} parent=1 // loop_header_branch
      %18 = sbr.rel (%p16) target = $region8
    $region5: #{apply.1} parent=1 // loop_body
      %s20 = ssub.s32 %s15, 1
      %s21 = ssub.s32 %s15, 2
      %s22 = sadd.s32 %s15, 1
      %s23 = ssub.s32 %s15, %s22
      %p24 = scmp.eq.s32.totalorder %s23, 0
      %s26 = sadd.s32 %s25, 1
      %s27 = scalar_select %p24, %s25, %s26
      %p30 = pneg %p24
      %p31 = scmp.eq.s32.totalorder %s15, 1
      %p32 = por %p30, %p31
      %p33 = scmp.ne.s32.totalorder %s25, %s28
      %p34 = scmp.eq.s32.totalorder %s15, 0
      %p35 = por %p33, %p34
      %p36 = scmp.ne.s32.totalorder %s25, %s28
      %p37 = scmp.eq.s32.totalorder %s20, 1
      %p38 = por %p36, %p37
      %p39 = scmp.ne.s32.totalorder %s28, %s29
      %p40 = scmp.eq.s32.totalorder %s20, 0
      %p41 = por %p39, %p40
      %p42 = scmp.ne.s32.totalorder %s28, %s29
      %p43 = scmp.eq.s32.totalorder %s21, 1
      %p44 = por %p42, %p43
      %p46 = scmp.ne.s32.totalorder %s29, %s45
      %p47 = scmp.eq.s32.totalorder %s21, 0
      %p48 = por %p46, %p47
      %s50 = sadd.s32 %s49, 1
      %p53 = scmp.eq.s32.totalorder %s15, 1
      %p54 = scmp.ne.s32.totalorder %s49, %s51
      %p55 = scmp.eq.s32.totalorder %s15, 0
      %p56 = por %p54, %p55
      %p57 = scmp.ne.s32.totalorder %s49, %s51
      %p58 = scmp.eq.s32.totalorder %s20, 1
      %p59 = por %p57, %p58
      %p60 = scmp.ne.s32.totalorder %s51, %s52
      %p61 = scmp.eq.s32.totalorder %s20, 0
      %p62 = por %p60, %p61
      %p63 = scmp.ne.s32.totalorder %s51, %s52
      %p64 = scmp.eq.s32.totalorder %s21, 1
      %p65 = por %p63, %p64
      %p67 = scmp.ne.s32.totalorder %s52, %s66
      %p68 = scmp.eq.s32.totalorder %s21, 0
      %p69 = por %p67, %p68
      %s71 = sadd.s32 %s70, 1
      %p74 = scmp.eq.s32.totalorder %s15, 1
      %p75 = scmp.ne.s32.totalorder %s70, %s72
      %p76 = scmp.eq.s32.totalorder %s15, 0
      %p77 = por %p75, %p76
      %p78 = scmp.ne.s32.totalorder %s70, %s72
      %p79 = scmp.eq.s32.totalorder %s20, 1
      %p80 = por %p78, %p79
      %p81 = scmp.ne.s32.totalorder %s72, %s73
      %p82 = scmp.eq.s32.totalorder %s20, 0
      %p83 = por %p81, %p82
      %p84 = scmp.ne.s32.totalorder %s72, %s73
      %p85 = scmp.eq.s32.totalorder %s21, 1
      %p86 = por %p84, %p85
      %p88 = scmp.ne.s32.totalorder %s73, %s87
      %p89 = scmp.eq.s32.totalorder %s21, 0
      %p90 = por %p88, %p89
      %s92 = sadd.s32 %s91, 1
      %p95 = scmp.eq.s32.totalorder %s15, 1
      %p96 = scmp.ne.s32.totalorder %s91, %s93
      %p97 = scmp.eq.s32.totalorder %s15, 0
      %p98 = por %p96, %p97
      %p99 = scmp.ne.s32.totalorder %s91, %s93
      %p100 = scmp.eq.s32.totalorder %s20, 1
      %p101 = por %p99, %p100
      %p102 = scmp.ne.s32.totalorder %s93, %s94
      %p103 = scmp.eq.s32.totalorder %s20, 0
      %p104 = por %p102, %p103
      %p105 = scmp.ne.s32.totalorder %s93, %s94
      %p106 = scmp.eq.s32.totalorder %s21, 1
      %p107 = por %p105, %p106
      %p109 = scmp.ne.s32.totalorder %s94, %s108
      %p110 = scmp.eq.s32.totalorder %s21, 0
      %p111 = por %p109, %p110
      %s113 = sadd.s32 %s112, 1
      %p116 = scmp.eq.s32.totalorder %s15, 1
      %p117 = scmp.ne.s32.totalorder %s112, %s114
      %p118 = scmp.eq.s32.totalorder %s15, 0
      %p119 = por %p117, %p118
      %p120 = scmp.ne.s32.totalorder %s112, %s114
      %p121 = scmp.eq.s32.totalorder %s20, 1
      %p122 = por %p120, %p121
      %p123 = scmp.ne.s32.totalorder %s114, %s115
      %p124 = scmp.eq.s32.totalorder %s20, 0
      %p125 = por %p123, %p124
      %p126 = scmp.ne.s32.totalorder %s114, %s115
      %p127 = scmp.eq.s32.totalorder %s21, 1
      %p128 = por %p126, %p127
      %p130 = scmp.ne.s32.totalorder %s115, %s129
      %p131 = scmp.eq.s32.totalorder %s21, 0
      %p132 = por %p130, %p131
      %s133 = ssub.s32 %s15, %s22
      %p134 = scmp.eq.s32.totalorder %s133, 0
      %s136 = sadd.s32 %s135, 1
      %s137 = scalar_select %p134, %s135, %s136
      %p140 = pneg %p134
      %p141 = scmp.eq.s32.totalorder %s15, 1
      %p142 = por %p140, %p141
      %p143 = scmp.ne.s32.totalorder %s135, %s138
      %p144 = scmp.eq.s32.totalorder %s15, 0
      %p145 = por %p143, %p144
      %p146 = scmp.ne.s32.totalorder %s135, %s138
      %p147 = scmp.eq.s32.totalorder %s20, 1
      %p148 = por %p146, %p147
      %p149 = scmp.ne.s32.totalorder %s138, %s139
      %p150 = scmp.eq.s32.totalorder %s20, 0
      %p151 = por %p149, %p150
      %p152 = scmp.ne.s32.totalorder %s138, %s139
      %p153 = scmp.eq.s32.totalorder %s21, 1
      %p154 = por %p152, %p153
      %p156 = scmp.ne.s32.totalorder %s139, %s155
      %p157 = scmp.eq.s32.totalorder %s21, 0
      %p158 = por %p156, %p157
      %p159 = scmp.le.s32.totalorder 1, %s15
      %p160 = scmp.lt.s32.totalorder %s15, 3
      %p161 = pnand %p159, %p160
      %p162 = pneg %p161
      // Predicated region
      $region9: #{apply.1} parent=5 // pred_check
        _
      $region10: #{apply.1} parent=5 // pred_check_branch
        %164 = sbr.rel (%p161) target = $region12
      $region11: #{apply.1} parent=5 // pred_region
        %s165 = ssub.s32 %s15, 1
        // Predicated region
        $region13: #{apply.1} parent=11 // pred_check
          %p166 = pneg %p62
        $region14: #{apply.1} parent=11 // pred_check_branch
          %168 = sbr.rel (%p166) target = $region16
        $region15: #{apply.1} parent=11 // pred_region
          %s170 = ssub.s32 1024, 1024
          %171 = vsyncadd [#allocation3], %s170
          %s172 = sshll.u32 [#allocation2], 4
          %s173 = int_to_ptr.vmem [resolvable:$true] %s172
          %178 = dma.hbm_to_vmem [thread:$0]  %s1, 1024, %s173, [#allocation3], 64, 64, 4
        $region16: #{apply.1} parent=11 // pred_fallthru
          _
        // Predicated region
        $region17: #{apply.1} parent=11 // pred_check
          %p179 = pneg %p83
        $region18: #{apply.1} parent=11 // pred_check_branch
          %181 = sbr.rel (%p179) target = $region20
        $region19: #{apply.1} parent=11 // pred_region
          _
        $region20: #{apply.1} parent=11 // pred_fallthru
          _
        // Predicated region
        $region21: #{apply.1} parent=11 // pred_check
          %p182 = pneg %p104
        $region22: #{apply.1} parent=11 // pred_check_branch
          %184 = sbr.rel (%p182) target = $region24
        $region23: #{apply.1} parent=11 // pred_region
          _
        $region24: #{apply.1} parent=11 // pred_fallthru
          _
        // Predicated region
        $region25: #{apply.1} parent=11 // pred_check
          %p185 = pneg %p125
        $region26: #{apply.1} parent=11 // pred_check_branch
          %187 = sbr.rel (%p185) target = $region28
        $region27: #{apply.1} parent=11 // pred_region
          _
        $region28: #{apply.1} parent=11 // pred_fallthru
          _
      $region12: #{apply.1} parent=5 // pred_fallthru
        _
      %p188 = scmp.lt.s32.totalorder %s15, 2
      // Predicated region
      $region29: #{apply.1} parent=5 // pred_check
        %p189 = pneg %p188
      $region30: #{apply.1} parent=5 // pred_check_branch
        %191 = sbr.rel (%p189) target = $region32
      $region31: #{apply.1} parent=5 // pred_region
        // Predicated region
        $region33: #{apply.1} parent=31 // pred_check
          %p192 = pneg %p35
        $region34: #{apply.1} parent=31 // pred_check_branch
          %194 = sbr.rel (%p192) target = $region36
        $region35: #{apply.1} parent=31 // pred_region
          %p195 = scmp.lt.s32.totalorder %s15, 1
          %s196 = scalar_select %p195, %s15, 1
          %s197 = smul.addr %s196, 8
          %s198 = scalar_lea.vmem %s0, %s197
        $region36: #{apply.1} parent=31 // pred_fallthru
          _
      $region32: #{apply.1} parent=5 // pred_fallthru
        _
      %p199 = scmp.le.s32.totalorder 1, %s15
      %p200 = scmp.lt.s32.totalorder %s15, 3
      %p201 = pnand %p199, %p200
      %p202 = pneg %p201
      // Predicated region
      $region37: #{apply.1} parent=5 // pred_check
        _
      $region38: #{apply.1} parent=5 // pred_check_branch
        %204 = sbr.rel (%p201) target = $region40
      $region39: #{apply.1} parent=5 // pred_region
        %s205 = ssub.s32 %s15, 1
        // Predicated region
        $region41: #{apply.1} parent=39 // pred_check
          %p206 = pneg %p62
        $region42: #{apply.1} parent=39 // pred_check_branch
          %208 = sbr.rel (%p206) target = $region44
        $region43: #{apply.1} parent=39 // pred_region
          %209 = dma.done [#allocation3], 1024
        $region44: #{apply.1} parent=39 // pred_fallthru
          _
        %p210 = scmp.lt.s32.totalorder %s20, 1
        %s211 = scalar_select %p210, %s20, 1
        %s212 = smul.addr %s211, 8
        %s213 = scalar_lea.vmem %s0, %s212
        %p214 = pneg %p41
        %p215 = pneg %p38
        %p216 = pneg %p62
        %p217 = pneg %p59
        %p218 = pneg %p83
        %p219 = pneg %p80
        %p220 = pneg %p104
        %p221 = pneg %p101
        %p222 = pneg %p125
        %p223 = pneg %p122
        %p224 = pneg %p151
        %p225 = pneg %p148
        %s226 = sand.u32 %s138, 1
        %s227 = scalar_lea.sflag [#allocation4], %s226
        %s228 = sand.u32 %s138, 1
        %s229 = smul.addr %s228, 8
        %s230 = scalar_lea.vmem [#allocation5], %s229
        %p231 = scmp.lt.s32.totalorder %s20, 1
        %s232 = scalar_select %p231, %s20, 1
        %s233 = smul.addr %s232, 8
        %s234 = scalar_lea.vmem %s0, %s233
        %v236 = vld [vmem:[%s234] sm:$0xff]
        %v237 = vmax.f32 %v236, 0.0
        %v238 = vpack.c.bf16 %v237, %v237
        %v239 = vld [vmem:[#allocation2] sm:$0xf]
        %v240 = vld [vmem:[#allocation2 + $0x4] sm:$0xf]
        %v241 = vld [vmem:[#allocation2 + $0x8] sm:$0xf]
        %v242 = vld [vmem:[#allocation2 + $0xc] sm:$0xf]
        %v243 = vld [vmem:[#allocation2 + $0x10] sm:$0xf]
        %v244 = vld [vmem:[#allocation2 + $0x14] sm:$0xf]
        %v245 = vld [vmem:[#allocation2 + $0x18] sm:$0xf]
        %v246 = vld [vmem:[#allocation2 + $0x1c] sm:$0xf]
        %v247 = vld [vmem:[#allocation2 + $0x20] sm:$0xf]
        %v248 = vld [vmem:[#allocation2 + $0x24] sm:$0xf]
        %v249 = vld [vmem:[#allocation2 + $0x28] sm:$0xf]
        %v250 = vld [vmem:[#allocation2 + $0x2c] sm:$0xf]
        %v251 = vld [vmem:[#allocation2 + $0x30] sm:$0xf]
        %v252 = vld [vmem:[#allocation2 + $0x34] sm:$0xf]
        %v253 = vld [vmem:[#allocation2 + $0x38] sm:$0xf]
        %v254 = vld [vmem:[#allocation2 + $0x3c] sm:$0xf]
        %v255 = vld [vmem:[%s2] sm:$0x1]
        %v257 = vlaneseq
        %v258 = vshrl.u32 %v257, 7
        %v259 = vsub.s32 0, %v258
        %v260 = vrot.slane %v255, %v259
        %v278 = vunpack.c.l.b16 %v239
        %v279 = vunpack.c.l.b16 %v240
        %v280 = vunpack.c.l.b16 %v241
        %v281 = vunpack.c.l.b16 %v242
        %v282 = vunpack.c.l.b16 %v243
        %v283 = vunpack.c.l.b16 %v244
        %v284 = vunpack.c.l.b16 %v245
        %v285 = vunpack.c.l.b16 %v246
        %v286 = vunpack.c.l.b16 %v247
        %v287 = vunpack.c.l.b16 %v248
        %v288 = vunpack.c.l.b16 %v249
        %v289 = vunpack.c.l.b16 %v250
        %v290 = vunpack.c.l.b16 %v251
        %v291 = vunpack.c.l.b16 %v252
        %v292 = vunpack.c.l.b16 %v253
        %v293 = vunpack.c.l.b16 %v254
        %v294 = vpack.c.b16 %v279, %v278
        %v295 = vpack.c.b16 %v281, %v280
        %v296 = vpack.c.b16 %v283, %v282
        %v297 = vpack.c.b16 %v285, %v284
        %v298 = vpack.c.b16 %v287, %v286
        %v299 = vpack.c.b16 %v289, %v288
        %v300 = vpack.c.b16 %v291, %v290
        %v301 = vpack.c.b16 %v293, %v292
        %310 = vmatprep.subr.bf16.mxu0 0
        %311 = vmatpush1.bf16.msra.mxu0 %v301
        %312 = vmatprep.subr.bf16.mxu0 0
        %313 = vmatpush1.bf16.msra.mxu0 %v300
        %314 = vmatprep.subr.bf16.mxu0 0
        %315 = vmatpush1.bf16.msra.mxu0 %v299
        %316 = vmatprep.subr.bf16.mxu0 0
        %317 = vmatpush1.bf16.msra.mxu0 %v298
        %318 = vmatprep.subr.bf16.mxu0 0
        %319 = vmatpush1.bf16.msra.mxu0 %v297
        %320 = vmatprep.subr.bf16.mxu0 0
        %321 = vmatpush1.bf16.msra.mxu0 %v296
        %322 = vmatprep.subr.bf16.mxu0 0
        %323 = vmatpush1.bf16.msra.mxu0 %v295
        %324 = vmatprep.subr.bf16.mxu0 0
        %325 = vmatpush1.bf16.msra.mxu0 %v294
        %326 = vmatprep.subr.bf16.mxu0 0
        %327 = vmatpush2.bf16.msra.mxu0 0
        %328 = vmatprep.subr.bf16.mxu0 0
        %329 = vmatpush2.bf16.msra.mxu0 0
        %330 = vmatprep.subr.bf16.mxu0 0
        %331 = vmatpush2.bf16.msra.mxu0 0
        %332 = vmatprep.subr.bf16.mxu0 0
        %333 = vmatpush2.bf16.msra.mxu0 0
        %334 = vmatprep.subr.bf16.mxu0 0
        %335 = vmatpush2.bf16.msra.mxu0 0
        %336 = vmatprep.subr.bf16.mxu0 0
        %337 = vmatpush2.bf16.msra.mxu0 0
        %338 = vmatprep.subr.bf16.mxu0 0
        %339 = vmatpush2.bf16.msra.mxu0 0
        %340 = vmatprep.subr.bf16.mxu0 0
        %341 = vmatpush2.bf16.msra.mxu0 0
        %342 = vmatprep.mubr.bf16.mxu0 0
        %343 = vmatmul.mubr.bf16.gmra.mxu0 %v238
        %v344 = vpop.f32.mrf.mxu0
        %v345 = vadd.f32 %v260, %v344
        %v346 = vpop.f32.mrf.mxu0
        %v347 = vpop.f32.mrf.mxu0
        %v348 = vpop.f32.mrf.mxu0
        %349 = vdwg.mxu0
        %v350 = vmax.f32 %v345, 0.0
        %v351 = vpack.c.bf16 %v350, %v350
        %v352 = vld [vmem:[%s3] sm:$0xf]
        %v353 = vld [vmem:[%s3 + $0x4] sm:$0xf]
        %v354 = vld [vmem:[%s3 + $0x8] sm:$0xf]
        %v355 = vld [vmem:[%s3 + $0xc] sm:$0xf]
        %v356 = vld [vmem:[%s3 + $0x10] sm:$0xf]
        %v357 = vld [vmem:[%s3 + $0x14] sm:$0xf]
        %v358 = vld [vmem:[%s3 + $0x18] sm:$0xf]
        %v359 = vld [vmem:[%s3 + $0x1c] sm:$0xf]
        %v360 = vld [vmem:[%s3 + $0x20] sm:$0xf]
        %v361 = vld [vmem:[%s3 + $0x24] sm:$0xf]
        %v362 = vld [vmem:[%s3 + $0x28] sm:$0xf]
        %v363 = vld [vmem:[%s3 + $0x2c] sm:$0xf]
        %v364 = vld [vmem:[%s3 + $0x30] sm:$0xf]
        %v365 = vld [vmem:[%s3 + $0x34] sm:$0xf]
        %v366 = vld [vmem:[%s3 + $0x38] sm:$0xf]
        %v367 = vld [vmem:[%s3 + $0x3c] sm:$0xf]
        %v368 = vld [vmem:[%s4] sm:$0x1]
        %v370 = vlaneseq
        %v371 = vshrl.u32 %v370, 7
        %v372 = vsub.s32 0, %v371
        %v373 = vrot.slane %v368, %v372
        %v391 = vunpack.c.l.b16 %v352
        %v392 = vunpack.c.l.b16 %v353
        %v393 = vunpack.c.l.b16 %v354
        %v394 = vunpack.c.l.b16 %v355
        %v395 = vunpack.c.l.b16 %v356
        %v396 = vunpack.c.l.b16 %v357
        %v397 = vunpack.c.l.b16 %v358
        %v398 = vunpack.c.l.b16 %v359
        %v399 = vunpack.c.l.b16 %v360
        %v400 = vunpack.c.l.b16 %v361
        %v401 = vunpack.c.l.b16 %v362
        %v402 = vunpack.c.l.b16 %v363
        %v403 = vunpack.c.l.b16 %v364
        %v404 = vunpack.c.l.b16 %v365
        %v405 = vunpack.c.l.b16 %v366
        %v406 = vunpack.c.l.b16 %v367
        %v407 = vpack.c.b16 %v392, %v391
        %v408 = vpack.c.b16 %v394, %v393
        %v409 = vpack.c.b16 %v396, %v395
        %v410 = vpack.c.b16 %v398, %v397
        %v411 = vpack.c.b16 %v400, %v399
        %v412 = vpack.c.b16 %v402, %v401
        %v413 = vpack.c.b16 %v404, %v403
        %v414 = vpack.c.b16 %v406, %v405
        %423 = vmatprep.subr.bf16.mxu0 0
        %424 = vmatpush1.bf16.msra.mxu0 %v414
        %425 = vmatprep.subr.bf16.mxu0 0
        %426 = vmatpush1.bf16.msra.mxu0 %v413
        %427 = vmatprep.subr.bf16.mxu0 0
        %428 = vmatpush1.bf16.msra.mxu0 %v412
        %429 = vmatprep.subr.bf16.mxu0 0
        %430 = vmatpush1.bf16.msra.mxu0 %v411
        %431 = vmatprep.subr.bf16.mxu0 0
        %432 = vmatpush1.bf16.msra.mxu0 %v410
        %433 = vmatprep.subr.bf16.mxu0 0
        %434 = vmatpush1.bf16.msra.mxu0 %v409
        %435 = vmatprep.subr.bf16.mxu0 0
        %436 = vmatpush1.bf16.msra.mxu0 %v408
        %437 = vmatprep.subr.bf16.mxu0 0
        %438 = vmatpush1.bf16.msra.mxu0 %v407
        %439 = vmatprep.subr.bf16.mxu0 0
        %440 = vmatpush2.bf16.msra.mxu0 0
        %441 = vmatprep.subr.bf16.mxu0 0
        %442 = vmatpush2.bf16.msra.mxu0 0
        %443 = vmatprep.subr.bf16.mxu0 0
        %444 = vmatpush2.bf16.msra.mxu0 0
        %445 = vmatprep.subr.bf16.mxu0 0
        %446 = vmatpush2.bf16.msra.mxu0 0
        %447 = vmatprep.subr.bf16.mxu0 0
        %448 = vmatpush2.bf16.msra.mxu0 0
        %449 = vmatprep.subr.bf16.mxu0 0
        %450 = vmatpush2.bf16.msra.mxu0 0
        %451 = vmatprep.subr.bf16.mxu0 0
        %452 = vmatpush2.bf16.msra.mxu0 0
        %453 = vmatprep.subr.bf16.mxu0 0
        %454 = vmatpush2.bf16.msra.mxu0 0
        %455 = vmatprep.mubr.bf16.mxu0 0
        %456 = vmatmul.mubr.bf16.gmra.mxu0 %v351
        %v457 = vpop.f32.mrf.mxu0
        %v458 = vadd.f32 %v373, %v457
        %v459 = vpop.f32.mrf.mxu0
        %v460 = vpop.f32.mrf.mxu0
        %v461 = vpop.f32.mrf.mxu0
        %462 = vdwg.mxu0
        %v463 = vadd.f32 %v236, %v458
        %464 = vst [vmem:[%s230] sm:$0xff] %v463
        %s465 = sand.u32 %s138, 1
        %s466 = scalar_lea.sflag [#allocation4], %s465
        %s467 = sand.u32 %s138, 1
        %s468 = smul.addr %s467, 8
        %s469 = scalar_lea.vmem [#allocation5], %s468
        // Predicated region
        $region45: #{apply.1} parent=39 // pred_check
          %p470 = pneg %p148
        $region46: #{apply.1} parent=39 // pred_check_branch
          %472 = sbr.rel (%p470) target = $region48
        $region47: #{apply.1} parent=39 // pred_region
          %s474 = ssub.s32 128, 128
          %475 = vsyncadd %s466, %s474
          %s476 = smul.addr %s20, 128
          %s477 = scalar_lea.hbm %s5, %s476
          %s479 = sshll.u32 %s469, 4
          %s480 = int_to_ptr.vmem [resolvable:$true] %s479
          %482 = dma.vmem_to_hbm [thread:$0]  %s480, 128, %s477, %s466
        $region48: #{apply.1} parent=39 // pred_fallthru
          _
      $region40: #{apply.1} parent=5 // pred_fallthru
        _
      %p483 = scmp.le.s32.totalorder 2, %s15
      // Predicated region
      $region49: #{apply.1} parent=5 // pred_check
        %p484 = pneg %p483
      $region50: #{apply.1} parent=5 // pred_check_branch
        %486 = sbr.rel (%p484) target = $region52
      $region51: #{apply.1} parent=5 // pred_region
        %s487 = ssub.s32 %s15, 2
        // Predicated region
        $region53: #{apply.1} parent=51 // pred_check
          %p488 = pneg %p154
        $region54: #{apply.1} parent=51 // pred_check_branch
          %490 = sbr.rel (%p488) target = $region56
        $region55: #{apply.1} parent=51 // pred_region
          %s491 = sand.u32 %s139, 1
          %s492 = scalar_lea.sflag [#allocation4], %s491
          %s493 = sand.u32 %s139, 1
          %s494 = smul.addr %s493, 8
          %s495 = scalar_lea.vmem [#allocation5], %s494
          %496 = dma.done %s492, 128
        $region56: #{apply.1} parent=51 // pred_fallthru
          _
      $region52: #{apply.1} parent=5 // pred_fallthru
        _
    $region6: #{apply.1} parent=1 // loop_footer
      %s19 = sadd.s32 1, %s15
    $region7: #{apply.1} parent=1 // loop_footer_branch
      %14 = sbr.rel target = $region3
    $region8: #{apply.1} parent=1 // loop_exit
      _
    %497 = vsyncpa [#allocation3], 1
    %s498 = scalar_lea.sflag [#allocation3], 1
    %499 = vsyncpa %s498, 1
    %500 = vsyncpa [#allocation4], 1
    %s501 = scalar_lea.sflag [#allocation4], 1
    %502 = vsyncpa %s501, 1

</llo_original>
